<compile_context>
chip_gen: v7x
topology: tpu7x:2x2x1
jax: 0.10.0
libtpu: 0.0.40
codegen_flags: <defaults>
</compile_context>

<pallas_src>
from functools import partial  # noqa: F401  (kept for parity with typical kernel files)

import jax
import jax.numpy as jnp
from jax.experimental import pallas as pl
from jax.experimental.pallas import tpu as pltpu


def _drop_path_kernel(scale_ref, x_ref, o_ref):
    """scale_ref: (rt, 1) f32 per-row scale in {0, 1/keep_prob}; x/o: (rt, C)."""
    o_ref[...] = x_ref[...] * scale_ref[...].astype(o_ref.dtype)


def _pick_lane_width(f, max_lane=1024):
    """Largest multiple of 128 that divides f (capped at max_lane); 0 if none."""
    best = 0
    c = 128
    while c <= min(f, max_lane):
        if f % c == 0:
            best = c
        c += 128
    return best


def _pick_row_tile(rows, lane, itemsize, target_bytes=2 * 1024 * 1024):
    """Largest multiple of 8 that divides rows with tile <= ~2 MiB (else full rows)."""
    if rows % 8 != 0:
        return rows
    max_rt = max(8, target_bytes // max(1, lane * itemsize))
    best = 8
    rt = 8
    while rt <= min(rows, max_rt):
        if rows % rt == 0:
            best = rt
        rt += 8
    return best


def drop_path(x, drop_prob, *, training=True, seed=0):
    """Forward pass of DropPath. x: (B, ...) any rank >= 1."""
    if drop_prob == 0.0 or not training:
        return x                                        # identity, as in the PyTorch module

    keep_prob = 1.0 - float(drop_prob)
    orig_shape = x.shape
    B = orig_shape[0]
    F = 1
    for d in orig_shape[1:]:
        F *= d

    # Per-sample Bernoulli mask with the 1/keep_prob rescale folded in.
    # Tiny (B,) computation -> done once outside the kernel (hoisted out of the
    # per-tile steady-state loop, and consistent across batch/feature tiles).
    key = jax.random.PRNGKey(seed)
    u = jax.random.uniform(key, (B,), dtype=jnp.float32)
    random_tensor = jnp.floor(jnp.float32(keep_prob) + u)       # {0., 1.}
    scale = random_tensor / jnp.float32(keep_prob)              # {0, 1/keep_prob}

    # Lane-dense layout: fold features into (rows, C) with C a multiple of 128.
    # For small batch (B < 8) this folds each sample's features into extra rows,
    # restoring full sublane density.
    lane = _pick_lane_width(F)
    if lane == 0:
        # TODO(synk): pad F to a multiple of 128 for lane-dense stores; fall back
        # to a single (B, F) block for odd feature sizes.
        rows, lane, reps = B, F, 1
    else:
        reps = F // lane
        rows = B * reps

    x2d = x.reshape(rows, lane)
    scale_rows = jnp.repeat(scale, reps).reshape(rows, 1)

    itemsize = jnp.dtype(x.dtype).itemsize
    rt = _pick_row_tile(rows, lane, itemsize)
    grid = (rows // rt,)

    # NOTE: input_output_aliases={1: 0} could reuse x's HBM buffer if x is donated
    # at the jit boundary; omitted here since the script calls this un-jitted.
    y2d = pl.pallas_call(
        _drop_path_kernel,
        out_shape=jax.ShapeDtypeStruct((rows, lane), x.dtype),
        grid=grid,
        in_specs=[
            pl.BlockSpec((rt, 1), lambda i: (i, 0)),       # per-row scale
            pl.BlockSpec((rt, lane), lambda i: (i, 0)),    # activation tile
        ],
        out_specs=pl.BlockSpec((rt, lane), lambda i: (i, 0)),
        compiler_params=pltpu.CompilerParams(
            dimension_semantics=("parallel",)),
        cost_estimate=pl.CostEstimate(
            flops=rows * lane,
            transcendentals=0,
            bytes_accessed=2 * rows * lane * itemsize),
    )(scale_rows, x2d)
    return y2d.reshape(orig_shape)


if __name__ == "__main__":
    key = jax.random.PRNGKey(0)

    # Shapes as DropPath sees them in the encoder: (batch, seq, hidden).
    B, N, C = 2, 16, 32
    x = jax.random.normal(key, (B, N, C), dtype=jnp.float32)

    # 1) Eval / drop_prob == 0 path: exact identity.
    y_eval = drop_path(x, 0.0, training=False)
    assert y_eval is x or bool(jnp.array_equal(y_eval, x))

    # 2) Training path with drop_prob > 0.
    drop_prob = 0.3
    keep_prob = 1.0 - drop_prob
    y = jax.block_until_ready(drop_path(x, drop_prob, training=True, seed=1234))
    assert y.shape == x.shape

    # Per-sample semantics: each batch row is either all zeros (path dropped)
    # or exactly x_row / keep_prob (path kept, rescaled).
    y2 = y.reshape(B, -1)
    x2 = x.reshape(B, -1)
    for b in range(B):
        dropped = bool(jnp.all(y2[b] == 0.0))
        kept = bool(jnp.allclose(y2[b], x2[b] / keep_prob, rtol=1e-6, atol=1e-6))
        assert dropped or kept, f"row {b}: not a valid DropPath output"

    # 3) Determinism: same seed -> same mask -> identical output.
    y_again = jax.block_until_ready(drop_path(x, drop_prob, training=True, seed=1234))
    assert bool(jnp.array_equal(y, y_again))

    print("KERNEL_OK")
</pallas_src>

<mosaic_0001>
module attributes {stable_mosaic.version = 11 : i64} {
  func.func @_drop_path_kernel(%arg0: i32, %arg1: memref<2x1xf32, #tpu.memory_space<vmem>>, %arg2: memref<2x512xf32, #tpu.memory_space<vmem>>, %arg3: memref<2x512xf32, #tpu.memory_space<vmem>>) attributes {dimension_semantics = [#tpu.dimension_semantics<parallel>], iteration_bounds = array<i64: 1>, scalar_prefetch = 0 : i64, scratch_operands = 0 : i64, tpu.core_type = #tpu.core_type<tc>, window_params = [{transform_indices = @transform_0, window_bounds = array<i64: 2, 1>}, {transform_indices = @transform_1, window_bounds = array<i64: 2, 512>}, {transform_indices = @transform_2, window_bounds = array<i64: 2, 512>}]} {
    %c0 = arith.constant 0 : index
    %c0_0 = arith.constant 0 : index
    %0 = vector.load %arg2[%c0, %c0_0] : memref<2x512xf32, #tpu.memory_space<vmem>>, vector<2x512xf32>
    %c0_1 = arith.constant 0 : index
    %c0_2 = arith.constant 0 : index
    %1 = vector.load %arg1[%c0_1, %c0_2] : memref<2x1xf32, #tpu.memory_space<vmem>>, vector<2x1xf32>
    %2 = vector.broadcast %1 : vector<2x1xf32> to vector<2x512xf32>
    %3 = arith.mulf %0, %2 : vector<2x512xf32>
    %c0_3 = arith.constant 0 : index
    %c0_4 = arith.constant 0 : index
    %4 = vector.load %arg3[%c0_3, %c0_4] : memref<2x512xf32, #tpu.memory_space<vmem>>, vector<2x512xf32>
    tpu.vector_store %arg3[%c0_3, %c0_4], %3 {strides = array<i32>} : memref<2x512xf32, #tpu.memory_space<vmem>>, vector<2x512xf32>,
    return
  }
  func.func @transform_0(%arg0: i32) -> (i32, i32) {
    %c0_i32 = arith.constant 0 : i32
    %c0_i32_0 = arith.constant 0 : i32
    return %arg0, %c0_i32 : i32, i32
  }
  func.func @transform_1(%arg0: i32) -> (i32, i32) {
    %c0_i32 = arith.constant 0 : i32
    %c0_i32_0 = arith.constant 0 : i32
    return %arg0, %c0_i32 : i32, i32
  }
  func.func @transform_2(%arg0: i32) -> (i32, i32) {
    %c0_i32 = arith.constant 0 : i32
    %c0_i32_0 = arith.constant 0 : i32
    return %arg0, %c0_i32 : i32, i32
  }
}

</mosaic_0001>

<llo_original>
// kernel: tpu_custom_call.1
$region0: #{tpu_custom_call.1}
  #allocation0 [shape = 'u32[]', space=smem, size = 0x4, offset = 0x4, fixed_abs, tag = 'smem constant byte address 0x4 - core index']
  #allocation1 [shape = 'u32[144,128]{1,0:T(1,128)}', space=vmem, size = 0x12000, scoped, tag = 'internal scratch']
  %s0 = inlined_call_operand.vmem [shape: f32[2,1], index: 0, kind: input, shape index: {}]
  %s1 = inlined_call_operand.hbm [shape: f32[2,512], index: 1, kind: input, shape index: {}]
  %s2 = inlined_call_operand.hbm [shape: f32[2,512], index: 2, kind: output, shape index: {}]
  %s3 = sld [smem:[#allocation0]]
  $region22: #{tpu_custom_call.1} parent=0
    _
  %s5 = ssub.s32 1, %s3
  %s6 = scalar_select 0, %s5, %s3
  $region1: #{tpu_custom_call.1} parent=0
    #allocation2 [shape = 'u8[4096]{0}', space=vmem, size = 0x1000, scoped, tag = 'input window, operand 1, single buffered']
    #allocation3 [shape = 's32[1]{0}', space=sflag, size = 0x4, scoped, tag = 'scoped memory for tpu_custom_call.1']
    #allocation4 [shape = 's32[1]{0}', space=sflag, size = 0x4, scoped, tag = 'scoped memory for tpu_custom_call.1']
    #allocation5 [shape = 'u8[4096]{0}', space=vmem, size = 0x1000, scoped, tag = 'output window, operand 0, single buffered']
    %7 = vsyncpa [#allocation3], 0
    %8 = vsyncpa [#allocation4], 0
    // Predicated region
    $region2: #{tpu_custom_call.1} parent=1 // pred_check
      _
    $region3: #{tpu_custom_call.1} parent=1 // pred_check_branch
      %10 = sbr.rel (0) target = $region5
    $region4: #{tpu_custom_call.1} parent=1 // pred_region
      _
    $region5: #{tpu_custom_call.1} parent=1 // pred_fallthru
      _
    // Predicated region
    $region6: #{tpu_custom_call.1} parent=1 // pred_check
      _
    $region7: #{tpu_custom_call.1} parent=1 // pred_check_branch
      %12 = sbr.rel (0) target = $region9
    $region8: #{tpu_custom_call.1} parent=1 // pred_region
      %s14 = ssub.s32 128, 128
      %15 = vsyncadd [#allocation3], %s14
      %s17 = sshll.u32 [#allocation2], 4
      %s18 = int_to_ptr.vmem [resolvable:$true] %s17
      %20 = dma.hbm_to_vmem [thread:$0]  %s1, 128, %s18, [#allocation3]
    $region9: #{tpu_custom_call.1} parent=1 // pred_fallthru
      _
    // Predicated region
    $region10: #{tpu_custom_call.1} parent=1 // pred_check
      _
    $region11: #{tpu_custom_call.1} parent=1 // pred_check_branch
      %22 = sbr.rel (0) target = $region13
    $region12: #{tpu_custom_call.1} parent=1 // pred_region
      %23 = dma.done [#allocation3], 128
    $region13: #{tpu_custom_call.1} parent=1 // pred_fallthru
      _
    %v24 = vld [vmem:[#allocation2] sm:$0xff]
    %v25 = vld [vmem:[%s0] sm:$0x3]
    %27 = vset.pattern.permute.xlu0 0
    %28 = vperm.xlu0 %27, %v25
    %v29 = vpop.permute.xlu0 %28
    %v31 = vunpack.c.l.s4 269488144
    %v32 = vunpack.c.0.s8 %v31
    %v33 = vlaneseq
    %v34 = vshrl.u32 %v33, 7
    %v35 = vsub.s32 %v32, %v34
    %v36 = vrot.slane %v29, %v35
    %v38 = vmul.f32 %v24, %v36
    %39 = vst [vmem:[#allocation5] sm:$0xff] %v38
    // Predicated region
    $region14: #{tpu_custom_call.1} parent=1 // pred_check
      _
    $region15: #{tpu_custom_call.1} parent=1 // pred_check_branch
      %41 = sbr.rel (0) target = $region17
    $region16: #{tpu_custom_call.1} parent=1 // pred_region
      %s43 = ssub.s32 128, 128
      %44 = vsyncadd [#allocation4], %s43
      %s46 = sshll.u32 [#allocation5], 4
      %s47 = int_to_ptr.vmem [resolvable:$true] %s46
      %49 = dma.vmem_to_hbm [thread:$0]  %s47, 128, %s2, [#allocation4]
    $region17: #{tpu_custom_call.1} parent=1 // pred_fallthru
      _
    // Predicated region
    $region18: #{tpu_custom_call.1} parent=1 // pred_check
      _
    $region19: #{tpu_custom_call.1} parent=1 // pred_check_branch
      %51 = sbr.rel (0) target = $region21
    $region20: #{tpu_custom_call.1} parent=1 // pred_region
      %52 = dma.done [#allocation4], 128
    $region21: #{tpu_custom_call.1} parent=1 // pred_fallthru
      _
    %53 = vsyncpa [#allocation3], 1
    %54 = vsyncpa [#allocation4], 1

</llo_original>
